<compile_context>
chip_gen: v7x
topology: tpu7x:2x2x1
jax: 0.10.0
libtpu: 0.0.40
codegen_flags: <defaults>
</compile_context>

<pallas_src>
import functools

import jax
import jax.numpy as jnp
from jax.experimental import pallas as pl
from jax.experimental.pallas import tpu as pltpu


# ---------------------------------------------------------------------------
# Kernels
# ---------------------------------------------------------------------------

def _kernel_no_k(x_ref, wt_ref, b_ref, o_ref):
    """Weight-resident path: the whole reduction dim in one MXU call."""
    y = jnp.dot(x_ref[...], wt_ref[...], preferred_element_type=jnp.float32)
    o_ref[...] = jnp.maximum(y + b_ref[...], 0.0).astype(o_ref.dtype)


def _kernel_k_inplace(x_ref, wt_ref, b_ref, o_ref):
    """K-tiled path, f32 output: accumulate directly into the resident output."""
    k = pl.program_id(2)

    @pl.when(k == 0)
    def _():
        o_ref[...] = jnp.zeros_like(o_ref)

    o_ref[...] += jnp.dot(x_ref[...], wt_ref[...],
                          preferred_element_type=jnp.float32)

    @pl.when(k == pl.num_programs(2) - 1)
    def _():
        o_ref[...] = jnp.maximum(o_ref[...] + b_ref[...], 0.0)


def _kernel_k_acc(x_ref, wt_ref, b_ref, o_ref, acc_ref):
    """K-tiled path, non-f32 output: f32 VMEM accumulator, cast at the end."""
    k = pl.program_id(2)

    @pl.when(k == 0)
    def _():
        acc_ref[...] = jnp.zeros_like(acc_ref)

    acc_ref[...] += jnp.dot(x_ref[...], wt_ref[...],
                            preferred_element_type=jnp.float32)

    @pl.when(k == pl.num_programs(2) - 1)
    def _():
        o_ref[...] = jnp.maximum(acc_ref[...] + b_ref[...],
                                 0.0).astype(o_ref.dtype)


# ---------------------------------------------------------------------------
# Wrapper helpers
# ---------------------------------------------------------------------------

def _round_up(v, m):
    return ((v + m - 1) // m) * m


def _vmem_capacity_bytes():
    """Per-TensorCore VMEM (64 MiB on v7x, 128 MiB on v5e/v6e)."""
    try:
        cap = getattr(pltpu.get_tpu_info(), "vmem_capacity_bytes", None)
        if cap:
            return int(cap)
    except Exception:
        pass
    return 64 * 2**20  # conservative default (v7x per-core)


def _vmem_need(tm, tn, tk, cbytes, obytes, with_acc):
    need = 2 * tm * tk * cbytes          # x tile (double-buffered)
    need += 2 * tk * tn * cbytes         # W^T tile (double-buffered)
    need += 2 * 8 * tn * 4               # bias (sublane-padded to 8 rows)
    need += 2 * tm * tn * obytes         # output tile (double-buffered)
    if with_acc:
        need += tm * tn * 4              # f32 accumulator scratch
    return need


def _pad_cast_2d(a, rows, cols, dtype):
    """Cast (no-op if dtypes match); only materialize a padded copy if needed."""
    r, c = a.shape
    a = a.astype(dtype)
    if r == rows and c == cols:
        return a
    return jnp.zeros((rows, cols), dtype).at[:r, :c].set(a)


def _pick_tm(batch):
    """Batch tile: multiple of 8, <= 512, with small padding waste."""
    if batch <= 512:
        return _round_up(batch, 8)
    for cand in (512, 384, 256, 192, 128, 64, 32, 16, 8):
        if _round_up(batch, cand) - batch <= max(batch // 16, 8):
            return cand
    return 8  # unreachable (cand=8 always satisfies the bound above)


# ---------------------------------------------------------------------------
# Public entry point
# ---------------------------------------------------------------------------

def _nonlinear_block_impl(x, weight, bias, compute_dtype, force_kgrid):
    batch, in_feat = x.shape
    out_feat = weight.shape[0]
    out_dtype = x.dtype

    cbytes = jnp.dtype(compute_dtype).itemsize
    obytes = jnp.dtype(out_dtype).itemsize

    # Padded feature dims: lane axis multiples of 128; out-features padded to a
    # multiple of 256 so N tiles always fill the 256-wide v6e/v7x MXU.
    in_p = _round_up(in_feat, 128)
    out_p = _round_up(out_feat, 256) if out_feat > 128 else _round_up(out_feat, 128)

    tm = _pick_tm(batch)
    batch_p = _round_up(batch, tm)
    m_steps = batch_p // tm

    vmem_cap = _vmem_capacity_bytes()
    vmem_budget = (3 * vmem_cap) // 4        # ~25% headroom for Pallas internals

    weight_bytes = in_p * out_p * cbytes
    fast_path = (not force_kgrid
                 and weight_bytes <= vmem_budget // 4
                 and _vmem_need(tm, out_p, in_p, cbytes, obytes,
                                with_acc=False) <= vmem_budget)

    if fast_path:
        # --- weight-resident path: no K grid axis, no scratch ---------------
        tk = in_p
        tn = out_p
        # v7x has 2 TensorCores: keep >= 2 "parallel" grid steps when possible.
        if m_steps == 1 and out_p % 256 == 0:
            tn = out_p // 2
        grid = (m_steps, out_p // tn)
        in_specs = [
            pl.BlockSpec((tm, tk), lambda i, j: (i, 0)),   # x tile
            pl.BlockSpec((tk, tn), lambda i, j: (0, j)),   # W^T tile
            pl.BlockSpec((1, tn), lambda i, j: (0, j)),    # bias tile
        ]
        out_specs = pl.BlockSpec((tm, tn), lambda i, j: (i, j))
        kernel, scratch = _kernel_no_k, []
        dim_sem = ("parallel", "parallel")
        need = _vmem_need(tm, tn, tk, cbytes, obytes, with_acc=False)
    else:
        # --- K-tiled reduction path -----------------------------------------
        with_acc = out_dtype != jnp.float32
        tn_cands = [c for c in (out_p, 1024, 512, 256, 128)
                    if c <= out_p and out_p % c == 0]
        tk_cands = [c for c in (in_p, 1024, 512, 256, 128)
                    if c <= in_p and in_p % c == 0]
        if force_kgrid:              # test-only knob: exercise multi-step K/N
            tn_cands, tk_cands = [128], [128]
        tn, tk = tn_cands[-1], tk_cands[-1]
        found = False
        for tn_c in tn_cands:        # prefer the widest output tile that fits
            for tk_c in tk_cands:    # then the deepest reduction tile
                if _vmem_need(tm, tn_c, tk_c, cbytes, obytes,
                              with_acc) <= vmem_budget:
                    tn, tk, found = tn_c, tk_c, True
                    break
            if found:
                break
        grid = (m_steps, out_p // tn, in_p // tk)
        in_specs = [
            pl.BlockSpec((tm, tk), lambda i, j, k: (i, k)),   # x tile
            pl.BlockSpec((tk, tn), lambda i, j, k: (k, j)),   # W^T tile
            pl.BlockSpec((1, tn), lambda i, j, k: (0, j)),    # bias tile
        ]
        out_specs = pl.BlockSpec((tm, tn), lambda i, j, k: (i, j))
        if with_acc:
            kernel = _kernel_k_acc
            scratch = [pltpu.VMEM((tm, tn), jnp.float32)]
        else:
            kernel = _kernel_k_inplace   # accumulate into the resident output
            scratch = []
        dim_sem = ("parallel", "parallel", "arbitrary")
        need = _vmem_need(tm, tn, tk, cbytes, obytes, with_acc)

    # Pad/cast operands only when required (glue; folds under jit).  For
    # deployment, the weight should be stored pre-transposed / pre-cast.
    xp = _pad_cast_2d(x, batch_p, in_p, compute_dtype)
    wt = _pad_cast_2d(weight.T, in_p, out_p, compute_dtype)
    bp = _pad_cast_2d(bias.reshape(1, -1), 1, out_p, jnp.float32)

    vmem_limit = int(min(vmem_cap * 9 // 10, max(2 * need, 16 * 2**20)))

    out = pl.pallas_call(
        kernel,
        out_shape=jax.ShapeDtypeStruct((batch_p, out_p), out_dtype),
        grid_spec=pltpu.PrefetchScalarGridSpec(
            num_scalar_prefetch=0,
            grid=grid,
            in_specs=in_specs,
            out_specs=out_specs,
            scratch_shapes=scratch,
        ),
        compiler_params=pltpu.CompilerParams(
            dimension_semantics=dim_sem,
            vmem_limit_bytes=vmem_limit,
        ),
    )(xp, wt, bp)

    return out[:batch, :out_feat]


@functools.partial(jax.jit, static_argnames=("compute_dtype", "force_kgrid"))
def nonlinear_block(x, weight, bias, *, compute_dtype=jnp.bfloat16,
                    force_kgrid=False):
    """relu(x @ weight.T + bias) via a tiled Pallas TPU kernel.

    x:      (batch, in_feat)    float32
    weight: (out_feat, in_feat) (PyTorch nn.Linear convention)
    bias:   (out_feat,)
    compute_dtype: MXU operand dtype (f32 accumulation); accuracy/perf knob.
    force_kgrid: test-only — forces the K-tiled reduction path at tiny shapes.
    """
    return _nonlinear_block_impl(x, weight, bias, compute_dtype, force_kgrid)


# ---------------------------------------------------------------------------
# Correctness checks
# ---------------------------------------------------------------------------

def _reference(x, weight, bias):
    return jnp.maximum(x @ weight.T + bias, 0.0)


def _run_case(key, batch, in_feat, out_feat, **kwargs):
    kx, kw, kb = jax.random.split(key, 3)
    bound = 1.0 / float(in_feat) ** 0.5
    weight = jax.random.uniform(kw, (out_feat, in_feat), jnp.float32, -bound, bound)
    bias = jax.random.uniform(kb, (out_feat,), jnp.float32, -bound, bound)
    x = jax.random.normal(kx, (batch, in_feat), jnp.float32)

    out = jax.block_until_ready(nonlinear_block(x, weight, bias, **kwargs))
    ref = _reference(x, weight, bias)

    assert out.shape == (batch, out_feat), (out.shape, (batch, out_feat))
    # bf16 MXU operands (f32 accumulation) -> relaxed tolerance vs f32 reference.
    assert jnp.allclose(out, ref, atol=2e-2, rtol=2e-2), (
        "mismatch vs reference: max abs err = "
        f"{float(jnp.max(jnp.abs(out - ref)))}")


if __name__ == "__main__":
    key = jax.random.PRNGKey(0)
    k1, k2, k3 = jax.random.split(key, 3)

    # Toy shape implied by the module: x (batch, in_feat) -> relu(fc(x)).
    _run_case(k1, batch=8, in_feat=32, out_feat=64)

    # Padding + N-split weight-resident fast path (exercises tn = out_p // 2).
    _run_case(k2, batch=300, in_feat=384, out_feat=320)

    # Force the K-tiled reduction path so its pl.when / accumulation logic is
    # also correctness-checked at small shapes.
    _run_case(k3, batch=96, in_feat=512, out_feat=256, force_kgrid=True)

    print("KERNEL_OK")
</pallas_src>

<mosaic_0001>
module attributes {stable_mosaic.version = 11 : i64} {
  func.func @_kernel_no_k(%arg0: i32, %arg1: i32, %arg2: memref<8x128xbf16, #tpu.memory_space<vmem>>, %arg3: memref<128x128xbf16, #tpu.memory_space<vmem>>, %arg4: memref<1x128xf32, #tpu.memory_space<vmem>>, %arg5: memref<8x128xf32, #tpu.memory_space<vmem>>) attributes {dimension_semantics = [#tpu.dimension_semantics<parallel>, #tpu.dimension_semantics<parallel>], iteration_bounds = array<i64: 1, 1>, scalar_prefetch = 0 : i64, scratch_operands = 0 : i64, tpu.core_type = #tpu.core_type<tc>, window_params = [{transform_indices = @transform_0, window_bounds = array<i64: 8, 128>}, {transform_indices = @transform_1, window_bounds = array<i64: 128, 128>}, {transform_indices = @transform_2, window_bounds = array<i64: 1, 128>}, {transform_indices = @transform_3, window_bounds = array<i64: 8, 128>}]} {
    %c0 = arith.constant 0 : index
    %c0_0 = arith.constant 0 : index
    %0 = vector.load %arg2[%c0, %c0_0] : memref<8x128xbf16, #tpu.memory_space<vmem>>, vector<8x128xbf16>
    %c0_1 = arith.constant 0 : index
    %c0_2 = arith.constant 0 : index
    %1 = vector.load %arg3[%c0_1, %c0_2] : memref<128x128xbf16, #tpu.memory_space<vmem>>, vector<128x128xbf16>
    %cst = arith.constant dense<0.000000e+00> : vector<8x128xf32>
    %2 = tpu.matmul %0, %1, %cst {dimension_numbers = #tpu.dot_dimension_numbers<[1], [0], [0], [1], [0, 0, 1, 1], [], []>} : vector<8x128xbf16>, vector<128x128xbf16>, vector<8x128xf32> -> vector<8x128xf32>
    %c0_3 = arith.constant 0 : index
    %c0_4 = arith.constant 0 : index
    %3 = vector.load %arg4[%c0_3, %c0_4] : memref<1x128xf32, #tpu.memory_space<vmem>>, vector<1x128xf32>
    %4 = vector.broadcast %3 : vector<1x128xf32> to vector<8x128xf32>
    %5 = arith.addf %2, %4 : vector<8x128xf32>
    %cst_5 = arith.constant 0.000000e+00 : f32
    %6 = vector.broadcast %cst_5 : f32 to vector<8x128xf32>
    %7 = arith.maximumf %5, %6 : vector<8x128xf32>
    %c0_6 = arith.constant 0 : index
    %c0_7 = arith.constant 0 : index
    %8 = vector.load %arg5[%c0_6, %c0_7] : memref<8x128xf32, #tpu.memory_space<vmem>>, vector<8x128xf32>
    tpu.vector_store %arg5[%c0_6, %c0_7], %7 {strides = array<i32>} : memref<8x128xf32, #tpu.memory_space<vmem>>, vector<8x128xf32>,
    return
  }
  func.func @transform_0(%arg0: i32, %arg1: i32) -> (i32, i32) {
    %c0_i32 = arith.constant 0 : i32
    %c0_i32_0 = arith.constant 0 : i32
    return %arg0, %c0_i32 : i32, i32
  }
  func.func @transform_1(%arg0: i32, %arg1: i32) -> (i32, i32) {
    %c0_i32 = arith.constant 0 : i32
    %c0_i32_0 = arith.constant 0 : i32
    return %c0_i32, %arg1 : i32, i32
  }
  func.func @transform_2(%arg0: i32, %arg1: i32) -> (i32, i32) {
    %c0_i32 = arith.constant 0 : i32
    %c0_i32_0 = arith.constant 0 : i32
    return %c0_i32, %arg1 : i32, i32
  }
  func.func @transform_3(%arg0: i32, %arg1: i32) -> (i32, i32) {
    %c0_i32 = arith.constant 0 : i32
    return %arg0, %arg1 : i32, i32
  }
}

</mosaic_0001>

<llo_original>
// kernel: nonlinear_block.1
$region0: #{nonlinear_block.1}
  #allocation0 [shape = 'u32[]', space=smem, size = 0x4, offset = 0x4, fixed_abs, tag = 'smem constant byte address 0x4 - core index']
  #allocation1 [shape = 'u32[144,128]{1,0:T(1,128)}', space=vmem, size = 0x12000, scoped, tag = 'internal scratch']
  %s0 = inlined_call_operand.vmem [shape: bf16[8,128], index: 0, kind: input, shape index: {}]
  %s1 = inlined_call_operand.vmem [shape: bf16[128,128], index: 1, kind: input, shape index: {}]
  %s2 = inlined_call_operand.vmem [shape: f32[1,128], index: 2, kind: input, shape index: {}]
  %s3 = inlined_call_operand.hbm [shape: f32[8,128], index: 3, kind: output, shape index: {}]
  %s4 = sld [smem:[#allocation0]]
  $region22: #{nonlinear_block.1} parent=0
    _
  %s6 = ssub.s32 1, %s4
  %s7 = scalar_select 0, %s6, %s4
  $region1: #{nonlinear_block.1} parent=0
    #allocation2 [shape = 'u8[4096]{0}', space=vmem, size = 0x1000, scoped, tag = 'output window, operand 0, single buffered']
    #allocation3 [shape = 's32[1]{0}', space=sflag, size = 0x4, scoped, tag = 'scoped memory for nonlinear_block.1']
    %8 = vsyncpa [#allocation3], 0
    // Predicated region
    $region2: #{nonlinear_block.1} parent=1 // pred_check
      _
    $region3: #{nonlinear_block.1} parent=1 // pred_check_branch
      %10 = sbr.rel (0) target = $region5
    $region4: #{nonlinear_block.1} parent=1 // pred_region
      _
    $region5: #{nonlinear_block.1} parent=1 // pred_fallthru
      _
    // Predicated region
    $region6: #{nonlinear_block.1} parent=1 // pred_check
      _
    $region7: #{nonlinear_block.1} parent=1 // pred_check_branch
      %12 = sbr.rel (0) target = $region9
    $region8: #{nonlinear_block.1} parent=1 // pred_region
      _
    $region9: #{nonlinear_block.1} parent=1 // pred_fallthru
      _
    // Predicated region
    $region10: #{nonlinear_block.1} parent=1 // pred_check
      _
    $region11: #{nonlinear_block.1} parent=1 // pred_check_branch
      %14 = sbr.rel (0) target = $region13
    $region12: #{nonlinear_block.1} parent=1 // pred_region
      _
    $region13: #{nonlinear_block.1} parent=1 // pred_fallthru
      _
    %v16 = vld [vmem:[%s0] sm:$0xf]
    %v17 = vld [vmem:[%s1] sm:$0xf]
    %v18 = vld [vmem:[%s1 + $0x4] sm:$0xf]
    %v19 = vld [vmem:[%s1 + $0x8] sm:$0xf]
    %v20 = vld [vmem:[%s1 + $0xc] sm:$0xf]
    %v21 = vld [vmem:[%s1 + $0x10] sm:$0xf]
    %v22 = vld [vmem:[%s1 + $0x14] sm:$0xf]
    %v23 = vld [vmem:[%s1 + $0x18] sm:$0xf]
    %v24 = vld [vmem:[%s1 + $0x1c] sm:$0xf]
    %v25 = vld [vmem:[%s1 + $0x20] sm:$0xf]
    %v26 = vld [vmem:[%s1 + $0x24] sm:$0xf]
    %v27 = vld [vmem:[%s1 + $0x28] sm:$0xf]
    %v28 = vld [vmem:[%s1 + $0x2c] sm:$0xf]
    %v29 = vld [vmem:[%s1 + $0x30] sm:$0xf]
    %v30 = vld [vmem:[%s1 + $0x34] sm:$0xf]
    %v31 = vld [vmem:[%s1 + $0x38] sm:$0xf]
    %v32 = vld [vmem:[%s1 + $0x3c] sm:$0xf]
    %v33 = vld [vmem:[%s2] sm:$0x1]
    %v35 = vlaneseq
    %v36 = vshrl.u32 %v35, 7
    %v37 = vsub.s32 0, %v36
    %v38 = vrot.slane %v33, %v37
    %v56 = vunpack.c.l.b16 %v17
    %v57 = vunpack.c.l.b16 %v18
    %v58 = vunpack.c.l.b16 %v19
    %v59 = vunpack.c.l.b16 %v20
    %v60 = vunpack.c.l.b16 %v21
    %v61 = vunpack.c.l.b16 %v22
    %v62 = vunpack.c.l.b16 %v23
    %v63 = vunpack.c.l.b16 %v24
    %v64 = vunpack.c.l.b16 %v25
    %v65 = vunpack.c.l.b16 %v26
    %v66 = vunpack.c.l.b16 %v27
    %v67 = vunpack.c.l.b16 %v28
    %v68 = vunpack.c.l.b16 %v29
    %v69 = vunpack.c.l.b16 %v30
    %v70 = vunpack.c.l.b16 %v31
    %v71 = vunpack.c.l.b16 %v32
    %v72 = vpack.c.b16 %v57, %v56
    %v73 = vpack.c.b16 %v59, %v58
    %v74 = vpack.c.b16 %v61, %v60
    %v75 = vpack.c.b16 %v63, %v62
    %v76 = vpack.c.b16 %v65, %v64
    %v77 = vpack.c.b16 %v67, %v66
    %v78 = vpack.c.b16 %v69, %v68
    %v79 = vpack.c.b16 %v71, %v70
    %88 = vmatprep.subr.bf16.mxu0 0
    %89 = vmatpush1.bf16.msra.mxu0 %v72
    %90 = vmatprep.subr.bf16.mxu0 0
    %91 = vmatpush1.bf16.msra.mxu0 %v73
    %92 = vmatprep.subr.bf16.mxu0 0
    %93 = vmatpush1.bf16.msra.mxu0 %v74
    %94 = vmatprep.subr.bf16.mxu0 0
    %95 = vmatpush1.bf16.msra.mxu0 %v75
    %96 = vmatprep.subr.bf16.mxu0 0
    %97 = vmatpush1.bf16.msra.mxu0 %v76
    %98 = vmatprep.subr.bf16.mxu0 0
    %99 = vmatpush1.bf16.msra.mxu0 %v77
    %100 = vmatprep.subr.bf16.mxu0 0
    %101 = vmatpush1.bf16.msra.mxu0 %v78
    %102 = vmatprep.subr.bf16.mxu0 0
    %103 = vmatpush1.bf16.msra.mxu0 %v79
    %104 = vmatprep.subr.bf16.mxu0 0
    %105 = vmatpush1.bf16.msra.mxu0 0
    %106 = vmatprep.subr.bf16.mxu0 0
    %107 = vmatpush1.bf16.msra.mxu0 0
    %108 = vmatprep.subr.bf16.mxu0 0
    %109 = vmatpush1.bf16.msra.mxu0 0
    %110 = vmatprep.subr.bf16.mxu0 0
    %111 = vmatpush1.bf16.msra.mxu0 0
    %112 = vmatprep.subr.bf16.mxu0 0
    %113 = vmatpush1.bf16.msra.mxu0 0
    %114 = vmatprep.subr.bf16.mxu0 0
    %115 = vmatpush1.bf16.msra.mxu0 0
    %116 = vmatprep.subr.bf16.mxu0 0
    %117 = vmatpush1.bf16.msra.mxu0 0
    %118 = vmatprep.subr.bf16.mxu0 0
    %119 = vmatpush1.bf16.msra.mxu0 0
    %120 = vmatprep.mubr.bf16.mxu0 0
    %121 = vmatmul.mubr.bf16.gmra.mrb[0].mxu0 %v16
    %v122 = vpop.f32.mrb[0].mxu0
    %v123 = vadd.f32 %v38, %v122
    %v124 = vpop.f32.mrb[0].mxu0
    %v125 = vpop.f32.mrb[0].mxu0
    %v126 = vpop.f32.mrb[0].mxu0
    %127 = vdwg.mxu0
    %v128 = vmax.f32 %v123, 0.0
    %129 = vst [vmem:[#allocation2] sm:$0xff] %v128
    // Predicated region
    $region14: #{nonlinear_block.1} parent=1 // pred_check
      _
    $region15: #{nonlinear_block.1} parent=1 // pred_check_branch
      %131 = sbr.rel (0) target = $region17
    $region16: #{nonlinear_block.1} parent=1 // pred_region
      %s133 = ssub.s32 128, 128
      %134 = vsyncadd [#allocation3], %s133
      %s136 = sshll.u32 [#allocation2], 4
      %s137 = int_to_ptr.vmem [resolvable:$true] %s136
      %139 = dma.vmem_to_hbm [thread:$0]  %s137, 128, %s3, [#allocation3]
    $region17: #{nonlinear_block.1} parent=1 // pred_fallthru
      _
    // Predicated region
    $region18: #{nonlinear_block.1} parent=1 // pred_check
      _
    $region19: #{nonlinear_block.1} parent=1 // pred_check_branch
      %141 = sbr.rel (0) target = $region21
    $region20: #{nonlinear_block.1} parent=1 // pred_region
      %142 = dma.done [#allocation3], 128
    $region21: #{nonlinear_block.1} parent=1 // pred_fallthru
      _
    %143 = vsyncpa [#allocation3], 1

</llo_original>
